<compile_context>
chip_gen: v7x
topology: tpu7x:2x2x1
jax: 0.10.0
libtpu: 0.0.40
codegen_flags: <defaults>
</compile_context>

<pallas_src>
import jax
import jax.numpy as jnp
from jax.experimental import pallas as pl
from jax.experimental.pallas import tpu as pltpu


# ----------------------------------------------------------------------------
# Fused Pallas kernel: att1 (both edge types) -> att2 (both edge types) -> fc
# -> concat(local_embed, G), all in VMEM.
# ----------------------------------------------------------------------------
def _make_kernel(es):
    bf16 = jnp.bfloat16
    f32 = jnp.float32

    def attend(s_dst, s_src, bias, feat_src):
        # Dense masked-softmax attention over sources; normalization deferred
        # until after the MXU aggregation (reciprocal runs on the EUP slot).
        logits = jax.nn.sigmoid(s_dst + jnp.transpose(s_src)) + bias      # [D, S]
        m = jnp.max(logits, axis=1, keepdims=True)
        p = jnp.exp(logits - m)                       # masked entries underflow to 0
        rinv = pl.reciprocal(jnp.sum(p, axis=1, keepdims=True), approx=True)
        agg = jnp.dot(p.astype(bf16), feat_src.astype(bf16),
                      preferred_element_type=f32)     # [D, F]
        return rinv * agg

    def kernel(qu_ref, qi_ref, eu_ref, ei_ref, bui_ref, biu_ref,
               wu1_ref, wa1_ref, r2_ref, wa2_ref, cb_ref,
               outu_ref, outi_ref):
        qu = qu_ref[...]                              # [U, es]   f32
        qi = qi_ref[...]                              # [Ip, es]  f32
        bui = bui_ref[...]                            # [U, Ip]   additive mask
        biu = biu_ref[...]                            # [Ip, U]

        # ------------------ layer 1 (att1); its OV is discarded ------------------
        wu1 = wu1_ref[...]                            # [es, d1]  bf16
        u1u = jnp.dot(qu.astype(bf16), wu1, preferred_element_type=f32)   # [U, d1]
        u1i = jnp.dot(qi.astype(bf16), wu1, preferred_element_type=f32)   # [Ip, d1]

        wa1 = wa1_ref[...]                            # [2, es]  (row0=src, row1=dst)
        wa1s, wa1d = wa1[0:1, :], wa1[1:2, :]
        # attention score halves as VPU multiply + lane reduction (no N=1 matmul)
        s1su = jnp.sum(qu * wa1s, axis=1, keepdims=True)
        s1du = jnp.sum(qu * wa1d, axis=1, keepdims=True)
        s1si = jnp.sum(qi * wa1s, axis=1, keepdims=True)
        s1di = jnp.sum(qi * wa1d, axis=1, keepdims=True)

        # q1 = fc_upd1(q_dst + OK) = q_dst@Wu1 + a @ (q_src@Wu1)
        q1u = u1u + attend(s1du, s1si, bui, u1i)      # users aggregate from items
        q1i = u1i + attend(s1di, s1su, biu, u1u)      # items aggregate from users

        # ------------- layer 2 (att2) + final fc, algebraically folded -----------
        # G = relu(q1_dst @ A + a @ (q1_src @ (A+B)) + cb),  R2 = [A+B | A]
        r2 = r2_ref[...]                              # [d1, 2*es]  bf16
        z2u = jnp.dot(q1u.astype(bf16), r2, preferred_element_type=f32)   # [U, 2es]
        z2i = jnp.dot(q1i.astype(bf16), r2, preferred_element_type=f32)   # [Ip, 2es]
        m2u, d2u = z2u[:, :es], z2u[:, es:]
        m2i, d2i = z2i[:, :es], z2i[:, es:]

        wa2 = wa2_ref[...]                            # [2, d1]
        wa2s, wa2d = wa2[0:1, :], wa2[1:2, :]
        s2su = jnp.sum(q1u * wa2s, axis=1, keepdims=True)
        s2du = jnp.sum(q1u * wa2d, axis=1, keepdims=True)
        s2si = jnp.sum(q1i * wa2s, axis=1, keepdims=True)
        s2di = jnp.sum(q1i * wa2d, axis=1, keepdims=True)

        cb = cb_ref[...]                              # [1, es]  (b_V2@Wf_bot + fc_b)
        g_u = jnp.maximum(d2u + attend(s2du, s2si, bui, m2i) + cb, 0.0)   # [U, es]
        g_i = jnp.maximum(d2i + attend(s2di, s2su, biu, m2u) + cb, 0.0)   # [Ip, es]

        # fused final concat([E, G], axis=1) written straight to the outputs
        outu_ref[:, :es] = eu_ref[...]
        outu_ref[:, es:] = g_u
        outi_ref[:, :es] = ei_ref[...]
        outi_ref[:, es:] = g_i

    return kernel


# ----------------------------------------------------------------------------
# One-time prep (hoisted out of the forward): weight transposes + packing,
# att2/fc folding, adjacency -> additive bias, item-row padding.
# ----------------------------------------------------------------------------
def prepare(params, train_mat, domains):
    U, I = train_mat.shape
    Ip = ((I + 7) // 8) * 8                           # pad item rows to sublane multiple
    es = params["global_user_embed"].shape[1]
    d1 = params["att1"]["w_upd"].shape[0]
    d2 = params["att2"]["w_upd"].shape[0]

    mask_ui = jnp.zeros((U, Ip), jnp.float32).at[:, :I].set(train_mat)
    bias_ui = jnp.where(mask_ui > 0, 0.0, -1e30).astype(jnp.float32)   # user <- item
    bias_iu = jnp.transpose(bias_ui)                                   # item <- user

    # layer 1: only fc_upd and fc_att are used (layer-1 OV is discarded)
    wU1 = jnp.transpose(params["att1"]["w_upd"]).astype(jnp.bfloat16)  # [es, d1]
    watt1 = params["att1"]["w_att"].reshape(2, es).astype(jnp.float32)  # [src; dst]

    # layer 2 + fc folded: A = Wu2^T@Wf_top, B = Wv2^T@Wf_bot
    wU2 = jnp.transpose(params["att2"]["w_upd"])       # [d1, d2]
    wV2 = jnp.transpose(params["att2"]["w_V"])         # [d1, d2]
    Wf_top = jnp.transpose(params["fc_w"][:, :d2])     # [d2, es]
    Wf_bot = jnp.transpose(params["fc_w"][:, d2:])     # [d2, es]
    A = wU2 @ Wf_top
    B = wV2 @ Wf_bot
    R2 = jnp.concatenate([A + B, A], axis=1).astype(jnp.bfloat16)      # [d1, 2*es]
    watt2 = params["att2"]["w_att"].reshape(2, d1).astype(jnp.float32)
    cb = (params["att2"]["b_V"].reshape(1, d2) @ Wf_bot
          + params["fc_b"].reshape(1, es)).astype(jnp.float32)         # [1, es]

    def pad_rows(x):
        return jnp.zeros((Ip, x.shape[1]), x.dtype).at[: x.shape[0]].set(x)

    return {
        "num_items": I,
        "q_user": params["global_user_embed"],
        "q_item": pad_rows(params["global_item_embed"]),
        "E_u": {d: params["local_user_embed"][d] for d in domains},
        "E_i": {d: pad_rows(params["local_item_embed"][d]) for d in domains},
        "bias_ui": bias_ui, "bias_iu": bias_iu,
        "wU1": wU1, "watt1": watt1, "R2": R2, "watt2": watt2, "cb": cb,
    }


def hero_graph_forward(prep, domain):
    q_user = prep["q_user"]
    q_item = prep["q_item"]
    U, es = q_user.shape
    Ip = q_item.shape[0]

    vmem = pl.BlockSpec(memory_space=pltpu.MemorySpace.VMEM)
    out_u, out_i_p = pl.pallas_call(
        _make_kernel(es),
        out_shape=(jax.ShapeDtypeStruct((U, 2 * es), jnp.float32),
                   jax.ShapeDtypeStruct((Ip, 2 * es), jnp.float32)),
        in_specs=[vmem] * 11,
        out_specs=(vmem, vmem),
    )(q_user, q_item, prep["E_u"][domain], prep["E_i"][domain],
      prep["bias_ui"], prep["bias_iu"],
      prep["wU1"], prep["watt1"], prep["R2"], prep["watt2"], prep["cb"])
    return out_u, out_i_p[: prep["num_items"]]


# ----------------------------------------------------------------------------
# Pure-JAX reference (direct translation of the PyTorch module, f32, unfolded)
# ----------------------------------------------------------------------------
def _gat_ref(q_src, q_dst, adj, layer):
    din = q_src.shape[1]
    w_att = layer["w_att"]
    s_src = q_src @ w_att[:, :din].T
    s_dst = q_dst @ w_att[:, din:].T
    e = jax.nn.sigmoid(s_dst + s_src.T)
    logits = jnp.where(adj > 0, e, -1e30)
    p = jnp.exp(logits - jnp.max(logits, axis=1, keepdims=True)) * adj
    a = p / jnp.sum(p, axis=1, keepdims=True)
    ok = a @ q_src
    v = q_src @ layer["w_V"].T + layer["b_V"][None, :]
    ov = a @ v
    q_new = (q_dst + ok) @ layer["w_upd"].T
    return q_new, ov


def _forward_ref(params, adj_ui, adj_iu, domain):
    q_user = params["global_user_embed"]
    q_item = params["global_item_embed"]
    q_item1, _ = _gat_ref(q_user, q_item, adj_iu, params["att1"])
    q_user1, _ = _gat_ref(q_item, q_user, adj_ui, params["att1"])
    q_item2, ov_item = _gat_ref(q_user1, q_item1, adj_iu, params["att2"])
    q_user2, ov_user = _gat_ref(q_item1, q_user1, adj_ui, params["att2"])
    G_u = jax.nn.relu(jnp.concatenate([q_user2, ov_user], 1) @ params["fc_w"].T + params["fc_b"])
    G_i = jax.nn.relu(jnp.concatenate([q_item2, ov_item], 1) @ params["fc_w"].T + params["fc_b"])
    return (jnp.concatenate([params["local_user_embed"][domain], G_u], 1),
            jnp.concatenate([params["local_item_embed"][domain], G_i], 1))


# ----------------------------------------------------------------------------
# Deterministic parameter construction (mimics reset_parameters shapes)
# ----------------------------------------------------------------------------
def _xavier(key, shape):
    fan_out, fan_in = shape[0], shape[1]
    lim = (6.0 / (fan_in + fan_out)) ** 0.5
    return jax.random.uniform(key, shape, jnp.float32, -lim, lim)


def make_params(key, domains, num_users, num_items, embed_size):
    keys = iter(jax.random.split(key, 32))
    return {
        "local_user_embed": {d: _xavier(next(keys), (num_users, embed_size)) for d in domains},
        "local_item_embed": {d: _xavier(next(keys), (num_items, embed_size)) for d in domains},
        "global_user_embed": _xavier(next(keys), (num_users, embed_size)),
        "global_item_embed": _xavier(next(keys), (num_items, embed_size)),
        "att1": {
            "w_att": _xavier(next(keys), (1, 2 * embed_size)),
            "w_upd": _xavier(next(keys), (64, embed_size)),
            "w_V": _xavier(next(keys), (64, embed_size)),
            "b_V": jax.random.uniform(next(keys), (64,), jnp.float32, 0.0, 1.0),
        },
        "att2": {
            "w_att": _xavier(next(keys), (1, 2 * 64)),
            "w_upd": _xavier(next(keys), (16, 64)),
            "w_V": _xavier(next(keys), (16, 64)),
            "b_V": jax.random.uniform(next(keys), (16,), jnp.float32, 0.0, 1.0),
        },
        "fc_w": _xavier(next(keys), (embed_size, 16 * 2)),
        "fc_b": jax.random.uniform(next(keys), (embed_size,), jnp.float32, 0.0, 1.0),
    }


if __name__ == "__main__":
    domains = ["book", "movie"]
    num_users, num_items, embed_size = 8, 12, 32

    # synthetic train_mat: user u reviews item i iff (u + i) % 3 == 0
    u_idx = jnp.arange(num_users)[:, None]
    i_idx = jnp.arange(num_items)[None, :]
    train_mat = ((u_idx + i_idx) % 3 == 0).astype(jnp.float32)        # [U, I]
    assert bool(jnp.all(train_mat.sum(1) >= 1)) and bool(jnp.all(train_mat.sum(0) >= 1))

    params = make_params(jax.random.PRNGKey(0), domains, num_users, num_items, embed_size)
    prep = prepare(params, train_mat, domains)

    out_u, out_i = hero_graph_forward(prep, "book")
    out_u = jax.block_until_ready(out_u)
    out_i = jax.block_until_ready(out_i)

    assert out_u.shape == (num_users, 2 * embed_size)
    assert out_i.shape == (num_items, 2 * embed_size)

    # reference check (kernel uses bf16 MXU operands -> loose tolerance)
    adj_user_from_item = train_mat
    adj_item_from_user = jnp.transpose(train_mat)
    ref_u, ref_i = _forward_ref(params, adj_user_from_item, adj_item_from_user, "book")
    assert jnp.allclose(out_u, ref_u, atol=5e-2, rtol=5e-2), \
        float(jnp.max(jnp.abs(out_u - ref_u)))
    assert jnp.allclose(out_i, ref_i, atol=5e-2, rtol=5e-2), \
        float(jnp.max(jnp.abs(out_i - ref_i)))

    print("KERNEL_OK")
</pallas_src>

<mosaic_0001>
module attributes {stable_mosaic.version = 11 : i64} {
  func.func @kernel(%arg0: memref<8x32xf32, #tpu.memory_space<vmem>>, %arg1: memref<16x32xf32, #tpu.memory_space<vmem>>, %arg2: memref<8x32xf32, #tpu.memory_space<vmem>>, %arg3: memref<16x32xf32, #tpu.memory_space<vmem>>, %arg4: memref<8x16xf32, #tpu.memory_space<vmem>>, %arg5: memref<16x8xf32, #tpu.memory_space<vmem>>, %arg6: memref<32x64xbf16, #tpu.memory_space<vmem>>, %arg7: memref<2x32xf32, #tpu.memory_space<vmem>>, %arg8: memref<64x64xbf16, #tpu.memory_space<vmem>>, %arg9: memref<2x64xf32, #tpu.memory_space<vmem>>, %arg10: memref<1x32xf32, #tpu.memory_space<vmem>>, %arg11: memref<8x64xf32, #tpu.memory_space<vmem>>, %arg12: memref<16x64xf32, #tpu.memory_space<vmem>>) attributes {dimension_semantics = [], scalar_prefetch = 0 : i64, scratch_operands = 0 : i64, tpu.core_type = #tpu.core_type<tc>} {
    %c0 = arith.constant 0 : index
    %c0_0 = arith.constant 0 : index
    %0 = vector.load %arg0[%c0, %c0_0] : memref<8x32xf32, #tpu.memory_space<vmem>>, vector<8x32xf32>
    %c0_1 = arith.constant 0 : index
    %c0_2 = arith.constant 0 : index
    %1 = vector.load %arg1[%c0_1, %c0_2] : memref<16x32xf32, #tpu.memory_space<vmem>>, vector<16x32xf32>
    %c0_3 = arith.constant 0 : index
    %c0_4 = arith.constant 0 : index
    %2 = vector.load %arg4[%c0_3, %c0_4] : memref<8x16xf32, #tpu.memory_space<vmem>>, vector<8x16xf32>
    %c0_5 = arith.constant 0 : index
    %c0_6 = arith.constant 0 : index
    %3 = vector.load %arg5[%c0_5, %c0_6] : memref<16x8xf32, #tpu.memory_space<vmem>>, vector<16x8xf32>
    %c0_7 = arith.constant 0 : index
    %c0_8 = arith.constant 0 : index
    %4 = vector.load %arg6[%c0_7, %c0_8] : memref<32x64xbf16, #tpu.memory_space<vmem>>, vector<32x64xbf16>
    %5 = arith.truncf %0 : vector<8x32xf32> to vector<8x32xbf16>
    %cst = arith.constant dense<0.000000e+00> : vector<8x64xf32>
    %6 = tpu.matmul %5, %4, %cst {dimension_numbers = #tpu.dot_dimension_numbers<[1], [0], [0], [1], [0, 0, 1, 1], [], []>} : vector<8x32xbf16>, vector<32x64xbf16>, vector<8x64xf32> -> vector<8x64xf32>
    %7 = arith.truncf %1 : vector<16x32xf32> to vector<16x32xbf16>
    %cst_9 = arith.constant dense<0.000000e+00> : vector<16x64xf32>
    %8 = tpu.matmul %7, %4, %cst_9 {dimension_numbers = #tpu.dot_dimension_numbers<[1], [0], [0], [1], [0, 0, 1, 1], [], []>} : vector<16x32xbf16>, vector<32x64xbf16>, vector<16x64xf32> -> vector<16x64xf32>
    %c0_10 = arith.constant 0 : index
    %c0_11 = arith.constant 0 : index
    %9 = vector.load %arg7[%c0_10, %c0_11] : memref<2x32xf32, #tpu.memory_space<vmem>>, vector<2x32xf32>
    %10 = vector.extract_strided_slice %9 {offsets = [0, 0], sizes = [1, 32], strides = [1, 1]} : vector<2x32xf32> to vector<1x32xf32>
    %11 = vector.extract_strided_slice %9 {offsets = [1, 0], sizes = [1, 32], strides = [1, 1]} : vector<2x32xf32> to vector<1x32xf32>
    %12 = vector.broadcast %10 : vector<1x32xf32> to vector<8x32xf32>
    %13 = arith.mulf %0, %12 : vector<8x32xf32>
    %cst_12 = arith.constant dense<0.000000e+00> : vector<8xf32>
    %14 = vector.multi_reduction <add>, %13, %cst_12 [1] : vector<8x32xf32> to vector<8xf32>
    %15 = vector.shape_cast %14 : vector<8xf32> to vector<8x1xf32>
    %16 = vector.broadcast %11 : vector<1x32xf32> to vector<8x32xf32>
    %17 = arith.mulf %0, %16 : vector<8x32xf32>
    %cst_13 = arith.constant dense<0.000000e+00> : vector<8xf32>
    %18 = vector.multi_reduction <add>, %17, %cst_13 [1] : vector<8x32xf32> to vector<8xf32>
    %19 = vector.shape_cast %18 : vector<8xf32> to vector<8x1xf32>
    %20 = vector.broadcast %10 : vector<1x32xf32> to vector<16x32xf32>
    %21 = arith.mulf %1, %20 : vector<16x32xf32>
    %cst_14 = arith.constant dense<0.000000e+00> : vector<16xf32>
    %22 = vector.multi_reduction <add>, %21, %cst_14 [1] : vector<16x32xf32> to vector<16xf32>
    %23 = vector.shape_cast %22 : vector<16xf32> to vector<16x1xf32>
    %24 = vector.broadcast %11 : vector<1x32xf32> to vector<16x32xf32>
    %25 = arith.mulf %1, %24 : vector<16x32xf32>
    %cst_15 = arith.constant dense<0.000000e+00> : vector<16xf32>
    %26 = vector.multi_reduction <add>, %25, %cst_15 [1] : vector<16x32xf32> to vector<16xf32>
    %27 = vector.shape_cast %26 : vector<16xf32> to vector<16x1xf32>
    %28 = tpu.transpose %23, [1, 0] : vector<16x1xf32> -> vector<1x16xf32>
    %29 = vector.broadcast %19 : vector<8x1xf32> to vector<8x16xf32>
    %30 = vector.broadcast %28 : vector<1x16xf32> to vector<8x16xf32>
    %31 = arith.addf %29, %30 : vector<8x16xf32>
    %32 = arith.negf %31 : vector<8x16xf32>
    %33 = math.exp %32 : vector<8x16xf32>
    %cst_16 = arith.constant 1.000000e+00 : f32
    %34 = vector.broadcast %cst_16 : f32 to vector<8x16xf32>
    %35 = arith.addf %34, %33 : vector<8x16xf32>
    %36 = arith.divf %34, %35 : vector<8x16xf32>
    %37 = arith.addf %36, %2 : vector<8x16xf32>
    %cst_17 = arith.constant dense<0xFF800000> : vector<8xf32>
    %38 = vector.multi_reduction <maximumf>, %37, %cst_17 [1] : vector<8x16xf32> to vector<8xf32>
    %39 = vector.shape_cast %38 : vector<8xf32> to vector<8x1xf32>
    %40 = vector.broadcast %39 : vector<8x1xf32> to vector<8x16xf32>
    %41 = arith.subf %37, %40 : vector<8x16xf32>
    %42 = math.exp %41 : vector<8x16xf32>
    %cst_18 = arith.constant dense<0.000000e+00> : vector<8xf32>
    %43 = vector.multi_reduction <add>, %42, %cst_18 [1] : vector<8x16xf32> to vector<8xf32>
    %44 = vector.shape_cast %43 : vector<8xf32> to vector<8x1xf32>
    %45 = tpu.reciprocal %44 {approx = true} : vector<8x1xf32> -> vector<8x1xf32>
    %46 = arith.truncf %42 : vector<8x16xf32> to vector<8x16xbf16>
    %47 = arith.truncf %8 : vector<16x64xf32> to vector<16x64xbf16>
    %cst_19 = arith.constant dense<0.000000e+00> : vector<8x64xf32>
    %48 = tpu.matmul %46, %47, %cst_19 {dimension_numbers = #tpu.dot_dimension_numbers<[1], [0], [0], [1], [0, 0, 1, 1], [], []>} : vector<8x16xbf16>, vector<16x64xbf16>, vector<8x64xf32> -> vector<8x64xf32>
    %49 = vector.broadcast %45 : vector<8x1xf32> to vector<8x64xf32>
    %50 = arith.mulf %49, %48 : vector<8x64xf32>
    %51 = arith.addf %6, %50 : vector<8x64xf32>
    %52 = tpu.transpose %15, [1, 0] : vector<8x1xf32> -> vector<1x8xf32>
    %53 = vector.broadcast %27 : vector<16x1xf32> to vector<16x8xf32>
    %54 = vector.broadcast %52 : vector<1x8xf32> to vector<16x8xf32>
    %55 = arith.addf %53, %54 : vector<16x8xf32>
    %56 = arith.negf %55 : vector<16x8xf32>
    %57 = math.exp %56 : vector<16x8xf32>
    %cst_20 = arith.constant 1.000000e+00 : f32
    %58 = vector.broadcast %cst_20 : f32 to vector<16x8xf32>
    %59 = arith.addf %58, %57 : vector<16x8xf32>
    %60 = arith.divf %58, %59 : vector<16x8xf32>
    %61 = arith.addf %60, %3 : vector<16x8xf32>
    %cst_21 = arith.constant dense<0xFF800000> : vector<16xf32>
    %62 = vector.multi_reduction <maximumf>, %61, %cst_21 [1] : vector<16x8xf32> to vector<16xf32>
    %63 = vector.shape_cast %62 : vector<16xf32> to vector<16x1xf32>
    %64 = vector.broadcast %63 : vector<16x1xf32> to vector<16x8xf32>
    %65 = arith.subf %61, %64 : vector<16x8xf32>
    %66 = math.exp %65 : vector<16x8xf32>
    %cst_22 = arith.constant dense<0.000000e+00> : vector<16xf32>
    %67 = vector.multi_reduction <add>, %66, %cst_22 [1] : vector<16x8xf32> to vector<16xf32>
    %68 = vector.shape_cast %67 : vector<16xf32> to vector<16x1xf32>
    %69 = tpu.reciprocal %68 {approx = true} : vector<16x1xf32> -> vector<16x1xf32>
    %70 = arith.truncf %66 : vector<16x8xf32> to vector<16x8xbf16>
    %71 = arith.truncf %6 : vector<8x64xf32> to vector<8x64xbf16>
    %cst_23 = arith.constant dense<0.000000e+00> : vector<16x64xf32>
    %72 = tpu.matmul %70, %71, %cst_23 {dimension_numbers = #tpu.dot_dimension_numbers<[1], [0], [0], [1], [0, 0, 1, 1], [], []>} : vector<16x8xbf16>, vector<8x64xbf16>, vector<16x64xf32> -> vector<16x64xf32>
    %73 = vector.broadcast %69 : vector<16x1xf32> to vector<16x64xf32>
    %74 = arith.mulf %73, %72 : vector<16x64xf32>
    %75 = arith.addf %8, %74 : vector<16x64xf32>
    %c0_24 = arith.constant 0 : index
    %c0_25 = arith.constant 0 : index
    %76 = vector.load %arg8[%c0_24, %c0_25] : memref<64x64xbf16, #tpu.memory_space<vmem>>, vector<64x64xbf16>
    %77 = arith.truncf %51 : vector<8x64xf32> to vector<8x64xbf16>
    %cst_26 = arith.constant dense<0.000000e+00> : vector<8x64xf32>
    %78 = tpu.matmul %77, %76, %cst_26 {dimension_numbers = #tpu.dot_dimension_numbers<[1], [0], [0], [1], [0, 0, 1, 1], [], []>} : vector<8x64xbf16>, vector<64x64xbf16>, vector<8x64xf32> -> vector<8x64xf32>
    %79 = arith.truncf %75 : vector<16x64xf32> to vector<16x64xbf16>
    %cst_27 = arith.constant dense<0.000000e+00> : vector<16x64xf32>
    %80 = tpu.matmul %79, %76, %cst_27 {dimension_numbers = #tpu.dot_dimension_numbers<[1], [0], [0], [1], [0, 0, 1, 1], [], []>} : vector<16x64xbf16>, vector<64x64xbf16>, vector<16x64xf32> -> vector<16x64xf32>
    %81 = vector.extract_strided_slice %78 {offsets = [0, 0], sizes = [8, 32], strides = [1, 1]} : vector<8x64xf32> to vector<8x32xf32>
    %82 = vector.extract_strided_slice %78 {offsets = [0, 32], sizes = [8, 32], strides = [1, 1]} : vector<8x64xf32> to vector<8x32xf32>
    %83 = vector.extract_strided_slice %80 {offsets = [0, 0], sizes = [16, 32], strides = [1, 1]} : vector<16x64xf32> to vector<16x32xf32>
    %84 = vector.extract_strided_slice %80 {offsets = [0, 32], sizes = [16, 32], strides = [1, 1]} : vector<16x64xf32> to vector<16x32xf32>
    %c0_28 = arith.constant 0 : index
    %c0_29 = arith.constant 0 : index
    %85 = vector.load %arg9[%c0_28, %c0_29] : memref<2x64xf32, #tpu.memory_space<vmem>>, vector<2x64xf32>
    %86 = vector.extract_strided_slice %85 {offsets = [0, 0], sizes = [1, 64], strides = [1, 1]} : vector<2x64xf32> to vector<1x64xf32>
    %87 = vector.extract_strided_slice %85 {offsets = [1, 0], sizes = [1, 64], strides = [1, 1]} : vector<2x64xf32> to vector<1x64xf32>
    %88 = vector.broadcast %86 : vector<1x64xf32> to vector<8x64xf32>
    %89 = arith.mulf %51, %88 : vector<8x64xf32>
    %cst_30 = arith.constant dense<0.000000e+00> : vector<8xf32>
    %90 = vector.multi_reduction <add>, %89, %cst_30 [1] : vector<8x64xf32> to vector<8xf32>
    %91 = vector.shape_cast %90 : vector<8xf32> to vector<8x1xf32>
    %92 = vector.broadcast %87 : vector<1x64xf32> to vector<8x64xf32>
    %93 = arith.mulf %51, %92 : vector<8x64xf32>
    %cst_31 = arith.constant dense<0.000000e+00> : vector<8xf32>
    %94 = vector.multi_reduction <add>, %93, %cst_31 [1] : vector<8x64xf32> to vector<8xf32>
    %95 = vector.shape_cast %94 : vector<8xf32> to vector<8x1xf32>
    %96 = vector.broadcast %86 : vector<1x64xf32> to vector<16x64xf32>
    %97 = arith.mulf %75, %96 : vector<16x64xf32>
    %cst_32 = arith.constant dense<0.000000e+00> : vector<16xf32>
    %98 = vector.multi_reduction <add>, %97, %cst_32 [1] : vector<16x64xf32> to vector<16xf32>
    %99 = vector.shape_cast %98 : vector<16xf32> to vector<16x1xf32>
    %100 = vector.broadcast %87 : vector<1x64xf32> to vector<16x64xf32>
    %101 = arith.mulf %75, %100 : vector<16x64xf32>
    %cst_33 = arith.constant dense<0.000000e+00> : vector<16xf32>
    %102 = vector.multi_reduction <add>, %101, %cst_33 [1] : vector<16x64xf32> to vector<16xf32>
    %103 = vector.shape_cast %102 : vector<16xf32> to vector<16x1xf32>
    %c0_34 = arith.constant 0 : index
    %c0_35 = arith.constant 0 : index
    %104 = vector.load %arg10[%c0_34, %c0_35] : memref<1x32xf32, #tpu.memory_space<vmem>>, vector<1x32xf32>
    %105 = tpu.transpose %99, [1, 0] : vector<16x1xf32> -> vector<1x16xf32>
    %106 = vector.broadcast %95 : vector<8x1xf32> to vector<8x16xf32>
    %107 = vector.broadcast %105 : vector<1x16xf32> to vector<8x16xf32>
    %108 = arith.addf %106, %107 : vector<8x16xf32>
    %109 = arith.negf %108 : vector<8x16xf32>
    %110 = math.exp %109 : vector<8x16xf32>
    %cst_36 = arith.constant 1.000000e+00 : f32
    %111 = vector.broadcast %cst_36 : f32 to vector<8x16xf32>
    %112 = arith.addf %111, %110 : vector<8x16xf32>
    %113 = arith.divf %111, %112 : vector<8x16xf32>
    %114 = arith.addf %113, %2 : vector<8x16xf32>
    %cst_37 = arith.constant dense<0xFF800000> : vector<8xf32>
    %115 = vector.multi_reduction <maximumf>, %114, %cst_37 [1] : vector<8x16xf32> to vector<8xf32>
    %116 = vector.shape_cast %115 : vector<8xf32> to vector<8x1xf32>
    %117 = vector.broadcast %116 : vector<8x1xf32> to vector<8x16xf32>
    %118 = arith.subf %114, %117 : vector<8x16xf32>
    %119 = math.exp %118 : vector<8x16xf32>
    %cst_38 = arith.constant dense<0.000000e+00> : vector<8xf32>
    %120 = vector.multi_reduction <add>, %119, %cst_38 [1] : vector<8x16xf32> to vector<8xf32>
    %121 = vector.shape_cast %120 : vector<8xf32> to vector<8x1xf32>
    %122 = tpu.reciprocal %121 {approx = true} : vector<8x1xf32> -> vector<8x1xf32>
    %123 = arith.truncf %119 : vector<8x16xf32> to vector<8x16xbf16>
    %124 = arith.truncf %83 : vector<16x32xf32> to vector<16x32xbf16>
    %cst_39 = arith.constant dense<0.000000e+00> : vector<8x32xf32>
    %125 = tpu.matmul %123, %124, %cst_39 {dimension_numbers = #tpu.dot_dimension_numbers<[1], [0], [0], [1], [0, 0, 1, 1], [], []>} : vector<8x16xbf16>, vector<16x32xbf16>, vector<8x32xf32> -> vector<8x32xf32>
    %126 = vector.broadcast %122 : vector<8x1xf32> to vector<8x32xf32>
    %127 = arith.mulf %126, %125 : vector<8x32xf32>
    %128 = arith.addf %82, %127 : vector<8x32xf32>
    %129 = vector.broadcast %104 : vector<1x32xf32> to vector<8x32xf32>
    %130 = arith.addf %128, %129 : vector<8x32xf32>
    %cst_40 = arith.constant 0.000000e+00 : f32
    %131 = vector.broadcast %cst_40 : f32 to vector<8x32xf32>
    %132 = arith.maximumf %130, %131 : vector<8x32xf32>
    %133 = tpu.transpose %91, [1, 0] : vector<8x1xf32> -> vector<1x8xf32>
    %134 = vector.broadcast %103 : vector<16x1xf32> to vector<16x8xf32>
    %135 = vector.broadcast %133 : vector<1x8xf32> to vector<16x8xf32>
    %136 = arith.addf %134, %135 : vector<16x8xf32>
    %137 = arith.negf %136 : vector<16x8xf32>
    %138 = math.exp %137 : vector<16x8xf32>
    %cst_41 = arith.constant 1.000000e+00 : f32
    %139 = vector.broadcast %cst_41 : f32 to vector<16x8xf32>
    %140 = arith.addf %139, %138 : vector<16x8xf32>
    %141 = arith.divf %139, %140 : vector<16x8xf32>
    %142 = arith.addf %141, %3 : vector<16x8xf32>
    %cst_42 = arith.constant dense<0xFF800000> : vector<16xf32>
    %143 = vector.multi_reduction <maximumf>, %142, %cst_42 [1] : vector<16x8xf32> to vector<16xf32>
    %144 = vector.shape_cast %143 : vector<16xf32> to vector<16x1xf32>
    %145 = vector.broadcast %144 : vector<16x1xf32> to vector<16x8xf32>
    %146 = arith.subf %142, %145 : vector<16x8xf32>
    %147 = math.exp %146 : vector<16x8xf32>
    %cst_43 = arith.constant dense<0.000000e+00> : vector<16xf32>
    %148 = vector.multi_reduction <add>, %147, %cst_43 [1] : vector<16x8xf32> to vector<16xf32>
    %149 = vector.shape_cast %148 : vector<16xf32> to vector<16x1xf32>
    %150 = tpu.reciprocal %149 {approx = true} : vector<16x1xf32> -> vector<16x1xf32>
    %151 = arith.truncf %147 : vector<16x8xf32> to vector<16x8xbf16>
    %152 = arith.truncf %81 : vector<8x32xf32> to vector<8x32xbf16>
    %cst_44 = arith.constant dense<0.000000e+00> : vector<16x32xf32>
    %153 = tpu.matmul %151, %152, %cst_44 {dimension_numbers = #tpu.dot_dimension_numbers<[1], [0], [0], [1], [0, 0, 1, 1], [], []>} : vector<16x8xbf16>, vector<8x32xbf16>, vector<16x32xf32> -> vector<16x32xf32>
    %154 = vector.broadcast %150 : vector<16x1xf32> to vector<16x32xf32>
    %155 = arith.mulf %154, %153 : vector<16x32xf32>
    %156 = arith.addf %84, %155 : vector<16x32xf32>
    %157 = vector.broadcast %104 : vector<1x32xf32> to vector<16x32xf32>
    %158 = arith.addf %156, %157 : vector<16x32xf32>
    %cst_45 = arith.constant 0.000000e+00 : f32
    %159 = vector.broadcast %cst_45 : f32 to vector<16x32xf32>
    %160 = arith.maximumf %158, %159 : vector<16x32xf32>
    %c0_46 = arith.constant 0 : index
    %c0_47 = arith.constant 0 : index
    %161 = vector.load %arg2[%c0_46, %c0_47] : memref<8x32xf32, #tpu.memory_space<vmem>>, vector<8x32xf32>
    %c0_48 = arith.constant 0 : index
    %c0_49 = arith.constant 0 : index
    %162 = vector.load %arg11[%c0_48, %c0_49] : memref<8x64xf32, #tpu.memory_space<vmem>>, vector<8x32xf32>
    tpu.vector_store %arg11[%c0_48, %c0_49], %161 {strides = array<i32>} : memref<8x64xf32, #tpu.memory_space<vmem>>, vector<8x32xf32>,
    %c0_50 = arith.constant 0 : index
    %c32 = arith.constant 32 : index
    %163 = vector.load %arg11[%c0_50, %c32] : memref<8x64xf32, #tpu.memory_space<vmem>>, vector<8x32xf32>
    tpu.vector_store %arg11[%c0_50, %c32], %132 {strides = array<i32>} : memref<8x64xf32, #tpu.memory_space<vmem>>, vector<8x32xf32>,
    %c0_51 = arith.constant 0 : index
    %c0_52 = arith.constant 0 : index
    %164 = vector.load %arg3[%c0_51, %c0_52] : memref<16x32xf32, #tpu.memory_space<vmem>>, vector<16x32xf32>
    %c0_53 = arith.constant 0 : index
    %c0_54 = arith.constant 0 : index
    %165 = vector.load %arg12[%c0_53, %c0_54] : memref<16x64xf32, #tpu.memory_space<vmem>>, vector<16x32xf32>
    tpu.vector_store %arg12[%c0_53, %c0_54], %164 {strides = array<i32>} : memref<16x64xf32, #tpu.memory_space<vmem>>, vector<16x32xf32>,
    %c0_55 = arith.constant 0 : index
    %c32_56 = arith.constant 32 : index
    %166 = vector.load %arg12[%c0_55, %c32_56] : memref<16x64xf32, #tpu.memory_space<vmem>>, vector<16x32xf32>
    tpu.vector_store %arg12[%c0_55, %c32_56], %160 {strides = array<i32>} : memref<16x64xf32, #tpu.memory_space<vmem>>, vector<16x32xf32>,
    return
  }
}

</mosaic_0001>

<llo_original>
// kernel: tpu_custom_call.1
$region0: #{tpu_custom_call.1}
  #allocation0 [shape = 'u32[]', space=smem, size = 0x4, offset = 0x4, fixed_abs, tag = 'smem constant byte address 0x4 - core index']
  #allocation1 [shape = 'u32[144,128]{1,0:T(1,128)}', space=vmem, size = 0x12000, scoped, tag = 'internal scratch']
  %s0 = inlined_call_operand.hbm [shape: f32[8,32], index: 0, kind: input, shape index: {}]
  %s1 = inlined_call_operand.vmem [shape: f32[16,32], index: 1, kind: input, shape index: {}]
  %s2 = inlined_call_operand.hbm [shape: f32[8,32], index: 2, kind: input, shape index: {}]
  %s3 = inlined_call_operand.hbm [shape: f32[16,32], index: 3, kind: input, shape index: {}]
  %s4 = inlined_call_operand.hbm [shape: f32[8,16], index: 4, kind: input, shape index: {}]
  %s5 = inlined_call_operand.vmem [shape: f32[16,8], index: 5, kind: input, shape index: {}]
  %s6 = inlined_call_operand.hbm [shape: bf16[32,64], index: 6, kind: input, shape index: {}]
  %s7 = inlined_call_operand.vmem [shape: f32[2,32], index: 7, kind: input, shape index: {}]
  %s8 = inlined_call_operand.vmem [shape: bf16[64,64], index: 8, kind: input, shape index: {}]
  %s9 = inlined_call_operand.vmem [shape: f32[2,64], index: 9, kind: input, shape index: {}]
  %s10 = inlined_call_operand.vmem [shape: f32[1,32], index: 10, kind: input, shape index: {}]
  %s11 = inlined_call_operand.hbm [shape: f32[8,64], index: 11, kind: output, shape index: {0}]
  %s12 = inlined_call_operand.hbm [shape: f32[16,64], index: 12, kind: output, shape index: {1}]
  %13 = xla_tuple %s11, %s12
  %s14 = sld [smem:[#allocation0]]
  $region82: #{tpu_custom_call.1} parent=0
    _
  %s16 = ssub.s32 1, %s14
  %s17 = scalar_select 0, %s16, %s14
  $region1: #{tpu_custom_call.1} parent=0
    #allocation2 [shape = 'u8[4096]{0}', space=vmem, size = 0x1000, scoped, tag = 'input window, operand 0, single buffered']
    #allocation3 [shape = 's32[1]{0}', space=sflag, size = 0x4, scoped, tag = 'scoped memory for tpu_custom_call.1']
    #allocation4 [shape = 's32[1]{0}', space=sflag, size = 0x4, scoped, tag = 'scoped memory for tpu_custom_call.1']
    #allocation5 [shape = 'u8[4096]{0}', space=vmem, size = 0x1000, scoped, tag = 'input window, operand 2, single buffered']
    #allocation6 [shape = 's32[1]{0}', space=sflag, size = 0x4, scoped, tag = 'scoped memory for tpu_custom_call.1']
    #allocation7 [shape = 'u8[8192]{0}', space=vmem, size = 0x2000, scoped, tag = 'input window, operand 3, single buffered']
    #allocation8 [shape = 'u8[4096]{0}', space=vmem, size = 0x1000, scoped, tag = 'input window, operand 4, single buffered']
    #allocation9 [shape = 's32[1]{0}', space=sflag, size = 0x4, scoped, tag = 'scoped memory for tpu_custom_call.1']
    #allocation10 [shape = 'u8[8192]{0}', space=vmem, size = 0x2000, scoped, tag = 'input window, operand 6, single buffered']
    #allocation11 [shape = 'u8[4096]{0}', space=vmem, size = 0x1000, scoped, tag = 'output window, operand 0, single buffered']
    #allocation12 [shape = 'u8[8192]{0}', space=vmem, size = 0x2000, scoped, tag = 'output window, operand 1, single buffered']
    #allocation13 [shape = 's32[1]{0}', space=sflag, size = 0x4, scoped, tag = 'scoped memory for tpu_custom_call.1']
    %18 = vsyncpa [#allocation3], 0
    %19 = vsyncpa [#allocation6], 0
    %20 = vsyncpa [#allocation9], 0
    %21 = vsyncpa [#allocation4], 0
    %22 = vsyncpa [#allocation13], 0
    // Predicated region
    $region2: #{tpu_custom_call.1} parent=1 // pred_check
      _
    $region3: #{tpu_custom_call.1} parent=1 // pred_check_branch
      %24 = sbr.rel (0) target = $region5
    $region4: #{tpu_custom_call.1} parent=1 // pred_region
      %s26 = ssub.s32 128, 128
      %27 = vsyncadd [#allocation3], %s26
      %s29 = sshll.u32 [#allocation2], 4
      %s30 = int_to_ptr.vmem [resolvable:$true] %s29
      %32 = dma.hbm_to_vmem [thread:$0]  %s0, 128, %s30, [#allocation3]
    $region5: #{tpu_custom_call.1} parent=1 // pred_fallthru
      _
    // Predicated region
    $region6: #{tpu_custom_call.1} parent=1 // pred_check
      _
    $region7: #{tpu_custom_call.1} parent=1 // pred_check_branch
      %34 = sbr.rel (0) target = $region9
    $region8: #{tpu_custom_call.1} parent=1 // pred_region
      _
    $region9: #{tpu_custom_call.1} parent=1 // pred_fallthru
      _
    // Predicated region
    $region10: #{tpu_custom_call.1} parent=1 // pred_check
      _
    $region11: #{tpu_custom_call.1} parent=1 // pred_check_branch
      %36 = sbr.rel (0) target = $region13
    $region12: #{tpu_custom_call.1} parent=1 // pred_region
      %s38 = ssub.s32 128, 128
      %39 = vsyncadd [#allocation6], %s38
      %s41 = sshll.u32 [#allocation5], 4
      %s42 = int_to_ptr.vmem [resolvable:$true] %s41
      %44 = dma.hbm_to_vmem [thread:$0]  %s2, 128, %s42, [#allocation6]
    $region13: #{tpu_custom_call.1} parent=1 // pred_fallthru
      _
    // Predicated region
    $region14: #{tpu_custom_call.1} parent=1 // pred_check
      _
    $region15: #{tpu_custom_call.1} parent=1 // pred_check_branch
      %46 = sbr.rel (0) target = $region17
    $region16: #{tpu_custom_call.1} parent=1 // pred_region
      %s48 = ssub.s32 256, 256
      %49 = vsyncadd [#allocation6], %s48
      %s50 = sshll.u32 [#allocation7], 4
      %s51 = int_to_ptr.vmem [resolvable:$true] %s50
      %56 = dma.hbm_to_vmem [thread:$0]  %s3, 256, %s51, [#allocation6], 128, 128, 8
    $region17: #{tpu_custom_call.1} parent=1 // pred_fallthru
      _
    // Predicated region
    $region18: #{tpu_custom_call.1} parent=1 // pred_check
      _
    $region19: #{tpu_custom_call.1} parent=1 // pred_check_branch
      %58 = sbr.rel (0) target = $region21
    $region20: #{tpu_custom_call.1} parent=1 // pred_region
      %s60 = ssub.s32 128, 128
      %61 = vsyncadd [#allocation9], %s60
      %s63 = sshll.u32 [#allocation8], 4
      %s64 = int_to_ptr.vmem [resolvable:$true] %s63
      %66 = dma.hbm_to_vmem [thread:$0]  %s4, 128, %s64, [#allocation9]
    $region21: #{tpu_custom_call.1} parent=1 // pred_fallthru
      _
    // Predicated region
    $region22: #{tpu_custom_call.1} parent=1 // pred_check
      _
    $region23: #{tpu_custom_call.1} parent=1 // pred_check_branch
      %68 = sbr.rel (0) target = $region25
    $region24: #{tpu_custom_call.1} parent=1 // pred_region
      _
    $region25: #{tpu_custom_call.1} parent=1 // pred_fallthru
      _
    // Predicated region
    $region26: #{tpu_custom_call.1} parent=1 // pred_check
      _
    $region27: #{tpu_custom_call.1} parent=1 // pred_check_branch
      %70 = sbr.rel (0) target = $region29
    $region28: #{tpu_custom_call.1} parent=1 // pred_region
      %s72 = ssub.s32 256, 256
      %73 = vsyncadd [#allocation9], %s72
      %s74 = sshll.u32 [#allocation10], 4
      %s75 = int_to_ptr.vmem [resolvable:$true] %s74
      %80 = dma.hbm_to_vmem [thread:$0]  %s6, 256, %s75, [#allocation9], 64, 64, 4
    $region29: #{tpu_custom_call.1} parent=1 // pred_fallthru
      _
    // Predicated region
    $region30: #{tpu_custom_call.1} parent=1 // pred_check
      _
    $region31: #{tpu_custom_call.1} parent=1 // pred_check_branch
      %82 = sbr.rel (0) target = $region33
    $region32: #{tpu_custom_call.1} parent=1 // pred_region
      _
    $region33: #{tpu_custom_call.1} parent=1 // pred_fallthru
      _
    // Predicated region
    $region34: #{tpu_custom_call.1} parent=1 // pred_check
      _
    $region35: #{tpu_custom_call.1} parent=1 // pred_check_branch
      %84 = sbr.rel (0) target = $region37
    $region36: #{tpu_custom_call.1} parent=1 // pred_region
      _
    $region37: #{tpu_custom_call.1} parent=1 // pred_fallthru
      _
    // Predicated region
    $region38: #{tpu_custom_call.1} parent=1 // pred_check
      _
    $region39: #{tpu_custom_call.1} parent=1 // pred_check_branch
      %86 = sbr.rel (0) target = $region41
    $region40: #{tpu_custom_call.1} parent=1 // pred_region
      _
    $region41: #{tpu_custom_call.1} parent=1 // pred_fallthru
      _
    // Predicated region
    $region42: #{tpu_custom_call.1} parent=1 // pred_check
      _
    $region43: #{tpu_custom_call.1} parent=1 // pred_check_branch
      %88 = sbr.rel (0) target = $region45
    $region44: #{tpu_custom_call.1} parent=1 // pred_region
      _
    $region45: #{tpu_custom_call.1} parent=1 // pred_fallthru
      _
    // Predicated region
    $region46: #{tpu_custom_call.1} parent=1 // pred_check
      _
    $region47: #{tpu_custom_call.1} parent=1 // pred_check_branch
      %90 = sbr.rel (0) target = $region49
    $region48: #{tpu_custom_call.1} parent=1 // pred_region
      %91 = dma.done [#allocation3], 128
    $region49: #{tpu_custom_call.1} parent=1 // pred_fallthru
      _
    // Predicated region
    $region50: #{tpu_custom_call.1} parent=1 // pred_check
      _
    $region51: #{tpu_custom_call.1} parent=1 // pred_check_branch
      %93 = sbr.rel (0) target = $region53
    $region52: #{tpu_custom_call.1} parent=1 // pred_region
      %94 = dma.done [#allocation6], 128
    $region53: #{tpu_custom_call.1} parent=1 // pred_fallthru
      _
    // Predicated region
    $region54: #{tpu_custom_call.1} parent=1 // pred_check
      _
    $region55: #{tpu_custom_call.1} parent=1 // pred_check_branch
      %96 = sbr.rel (0) target = $region57
    $region56: #{tpu_custom_call.1} parent=1 // pred_region
      %97 = dma.done [#allocation6], 256
    $region57: #{tpu_custom_call.1} parent=1 // pred_fallthru
      _
    // Predicated region
    $region58: #{tpu_custom_call.1} parent=1 // pred_check
      _
    $region59: #{tpu_custom_call.1} parent=1 // pred_check_branch
      %99 = sbr.rel (0) target = $region61
    $region60: #{tpu_custom_call.1} parent=1 // pred_region
      %100 = dma.done [#allocation9], 128
    $region61: #{tpu_custom_call.1} parent=1 // pred_fallthru
      _
    // Predicated region
    $region62: #{tpu_custom_call.1} parent=1 // pred_check
      _
    $region63: #{tpu_custom_call.1} parent=1 // pred_check_branch
      %102 = sbr.rel (0) target = $region65
    $region64: #{tpu_custom_call.1} parent=1 // pred_region
      %103 = dma.done [#allocation9], 256
    $region65: #{tpu_custom_call.1} parent=1 // pred_fallthru
      _
    %v105 = vld [vmem:[#allocation2] sm:$0xff]
    %v106 = vld [vmem:[%s1] sm:$0xff]
    %v107 = vld [vmem:[%s1 + $0x8] sm:$0xff]
    %v108 = vld [vmem:[#allocation8] sm:$0xff]
    %v109 = vld [vmem:[%s5] sm:$0xff]
    %v110 = vld [vmem:[%s5 + $0x8] sm:$0xff]
    %v111 = vld [vmem:[#allocation10] sm:$0xf]
    %v112 = vld [vmem:[#allocation10 + $0x4] sm:$0xf]
    %v113 = vld [vmem:[#allocation10 + $0x8] sm:$0xf]
    %v114 = vld [vmem:[#allocation10 + $0xc] sm:$0xf]
    %v115 = vpack.c.bf16 %v105, %v105
    %v120 = vunpack.c.l.b16 %v111
    %v121 = vunpack.c.l.b16 %v112
    %v122 = vunpack.c.l.b16 %v113
    %v123 = vunpack.c.l.b16 %v114
    %v124 = vpack.c.b16 %v121, %v120
    %v125 = vpack.c.b16 %v123, %v122
    %vm128 = vcmask 261120
    %v130 = vsel %vm128, %v115, 0
    %132 = vmatprep.subr.bf16.mxu0 0
    %133 = vmatpush1.bf16.msra.mxu0 %v124
    %134 = vmatprep.subr.bf16.mxu0 0
    %135 = vmatpush1.bf16.msra.mxu0 %v125
    %136 = vmatprep.subr.bf16.mxu0 0
    %137 = vmatpush1.bf16.msra.mxu0 0
    %138 = vmatprep.subr.bf16.mxu0 0
    %139 = vmatpush1.bf16.msra.mxu0 0
    %140 = vmatprep.subr.bf16.mxu0 0
    %141 = vmatpush1.bf16.msra.mxu0 0
    %142 = vmatprep.subr.bf16.mxu0 0
    %143 = vmatpush1.bf16.msra.mxu0 0
    %144 = vmatprep.subr.bf16.mxu0 0
    %145 = vmatpush1.bf16.msra.mxu0 0
    %146 = vmatprep.subr.bf16.mxu0 0
    %147 = vmatpush1.bf16.msra.mxu0 0
    %148 = vmatprep.subr.bf16.mxu0 0
    %149 = vmatpush1.bf16.msra.mxu0 0
    %150 = vmatprep.subr.bf16.mxu0 0
    %151 = vmatpush1.bf16.msra.mxu0 0
    %152 = vmatprep.subr.bf16.mxu0 0
    %153 = vmatpush1.bf16.msra.mxu0 0
    %154 = vmatprep.subr.bf16.mxu0 0
    %155 = vmatpush1.bf16.msra.mxu0 0
    %156 = vmatprep.subr.bf16.mxu0 0
    %157 = vmatpush1.bf16.msra.mxu0 0
    %158 = vmatprep.subr.bf16.mxu0 0
    %159 = vmatpush1.bf16.msra.mxu0 0
    %160 = vmatprep.subr.bf16.mxu0 0
    %161 = vmatpush1.bf16.msra.mxu0 0
    %162 = vmatprep.subr.bf16.mxu0 0
    %163 = vmatpush1.bf16.msra.mxu0 0
    %164 = vmatprep.mubr.bf16.mxu0 0
    %165 = vmatmul.mubr.bf16.gmra.mrb[0].mxu0 %v130
    %v166 = vpop.f32.mrb[0].mxu0
    %v167 = vadd.f32 0.0, %v166
    %v168 = vpop.f32.mrb[0].mxu0
    %v169 = vpop.f32.mrb[0].mxu0
    %v170 = vpop.f32.mrb[0].mxu0
    %171 = vdwg.mxu0
    %v172 = vpack.c.bf16 %v107, %v106
    %v174 = vsel %vm128, %v172, 0
    %176 = vmatprep.subr.bf16.mxu0 0
    %177 = vmatpush1.bf16.msra.mxu0 %v124
    %178 = vmatprep.subr.bf16.mxu0 0
    %179 = vmatpush1.bf16.msra.mxu0 %v125
    %180 = vmatprep.subr.bf16.mxu0 0
    %181 = vmatpush1.bf16.msra.mxu0 0
    %182 = vmatprep.subr.bf16.mxu0 0
    %183 = vmatpush1.bf16.msra.mxu0 0
    %184 = vmatprep.subr.bf16.mxu0 0
    %185 = vmatpush1.bf16.msra.mxu0 0
    %186 = vmatprep.subr.bf16.mxu0 0
    %187 = vmatpush1.bf16.msra.mxu0 0
    %188 = vmatprep.subr.bf16.mxu0 0
    %189 = vmatpush1.bf16.msra.mxu0 0
    %190 = vmatprep.subr.bf16.mxu0 0
    %191 = vmatpush1.bf16.msra.mxu0 0
    %192 = vmatprep.subr.bf16.mxu0 0
    %193 = vmatpush1.bf16.msra.mxu0 0
    %194 = vmatprep.subr.bf16.mxu0 0
    %195 = vmatpush1.bf16.msra.mxu0 0
    %196 = vmatprep.subr.bf16.mxu0 0
    %197 = vmatpush1.bf16.msra.mxu0 0
    %198 = vmatprep.subr.bf16.mxu0 0
    %199 = vmatpush1.bf16.msra.mxu0 0
    %200 = vmatprep.subr.bf16.mxu0 0
    %201 = vmatpush1.bf16.msra.mxu0 0
    %202 = vmatprep.subr.bf16.mxu0 0
    %203 = vmatpush1.bf16.msra.mxu0 0
    %204 = vmatprep.subr.bf16.mxu0 0
    %205 = vmatpush1.bf16.msra.mxu0 0
    %206 = vmatprep.subr.bf16.mxu0 0
    %207 = vmatpush1.bf16.msra.mxu0 0
    %208 = vmatprep.mubr.bf16.mxu0 0
    %209 = vmatmul.mubr.bf16.gmra.mrb[0].mxu0 %v174
    %v210 = vpop.f32.mrb[0].mxu0
    %v211 = vadd.f32 0.0, %v210
    %v212 = vpop.f32.mrb[0].mxu0
    %v213 = vpop.f32.mrb[0].mxu0
    %v214 = vadd.f32 0.0, %v213
    %v215 = vpop.f32.mrb[0].mxu0
    %216 = vdwg.mxu0
    %v217 = vld [vmem:[%s7] sm:$0x3]
    %v218 = vlaneseq
    %v219 = vshrl.u32 %v218, 7
    %v220 = vsub.s32 0, %v219
    %v221 = vrot.slane %v217, %v220
    %v222 = vmul.f32 %v105, %v221
    %v223 = vsel %vm128, %v222, 0.0
    %224 = vadd.xlane.f32.xlu0 %v223
    %v225 = vpop.xlane.xlu0 %224
    %v226 = vlaneseq
    %v227 = vshrl.u32 %v226, 7
    %v228 = vsub.s32 1, %v227
    %v229 = vrot.slane %v217, %v228
    %v230 = vmul.f32 %v105, %v229
    %v231 = vsel %vm128, %v230, 0.0
    %232 = vadd.xlane.f32.xlu0 %v231
    %v233 = vpop.xlane.xlu0 %232
    %v234 = vmul.f32 %v106, %v221
    %v235 = vmul.f32 %v107, %v221
    %v236 = vsel %vm128, %v234, 0.0
    %237 = vadd.xlane.f32.xlu0 %v236
    %v238 = vpop.xlane.xlu0 %237
    %v239 = vsel %vm128, %v235, 0.0
    %240 = vadd.xlane.f32.xlu0 %v239
    %v241 = vpop.xlane.xlu0 %240
    %v242 = vmul.f32 %v106, %v229
    %v243 = vmul.f32 %v107, %v229
    %v244 = vsel %vm128, %v242, 0.0
    %245 = vadd.xlane.f32.xlu0 %v244
    %v246 = vpop.xlane.xlu0 %245
    %v247 = vsel %vm128, %v243, 0.0
    %248 = vadd.xlane.f32.xlu0 %v247
    %v249 = vpop.xlane.xlu0 %248
    %250 = vxpose.xlu0.b32.start [1/16] %v238, 128
    %251 = vxpose.xlu0.b32.cont [2/16] %v241, 128
    %252 = vxpose.xlu0.b32.cont [3/16] 0.0, 128
    %253 = vxpose.xlu0.b32.cont [4/16] 0.0, 128
    %254 = vxpose.xlu0.b32.cont [5/16] 0.0, 128
    %255 = vxpose.xlu0.b32.cont [6/16] 0.0, 128
    %256 = vxpose.xlu0.b32.cont [7/16] 0.0, 128
    %257 = vxpose.xlu0.b32.cont [8/16] 0.0, 128
    %258 = vxpose.xlu0.b32.cont [9/16] 0.0, 128
    %259 = vxpose.xlu0.b32.cont [10/16] 0.0, 128
    %260 = vxpose.xlu0.b32.cont [11/16] 0.0, 128
    %261 = vxpose.xlu0.b32.cont [12/16] 0.0, 128
    %262 = vxpose.xlu0.b32.cont [13/16] 0.0, 128
    %263 = vxpose.xlu0.b32.cont [14/16] 0.0, 128
    %264 = vxpose.xlu0.b32.cont [15/16] 0.0, 128
    %265 = vxpose.xlu0.b32.end [16/16] 0.0, 128
    %v266 = vpop.trf.xlu0
    %v267 = vpop.trf.xlu0
    %v268 = vpop.trf.xlu0
    %v269 = vpop.trf.xlu0
    %v270 = vpop.trf.xlu0
    %v271 = vpop.trf.xlu0
    %v272 = vpop.trf.xlu0
    %v273 = vpop.trf.xlu0
    %v274 = vpop.trf.xlu0
    %v275 = vpop.trf.xlu0
    %v276 = vpop.trf.xlu0
    %v277 = vpop.trf.xlu0
    %v278 = vpop.trf.xlu0
    %v279 = vpop.trf.xlu0
    %v280 = vpop.trf.xlu0
    %v281 = vpop.trf.xlu0
    %v282 = vlaneseq
    %v283 = vshrl.u32 %v282, 7
    %v284 = vsub.s32 0, %v283
    %v285 = vrot.slane %v266, %v284
    %v286 = vadd.f32 %v233, %v285
    %v287 = vxor.u32 %v286, 2147483648
    %v288 = vmul.f32 %v287, 1.442695
    %v289 = vpow.pop %v288
    %v290 = vadd.f32 %v289, 1.0
    %v291 = vrcp.pop %v290
    %v292 = vmul.f32 1.0, %v291
    %v293 = vadd.f32 %v292, %v108
    %vm294 = vcmask 130048
    %v295 = vsel %vm294, %v293, -inf
    %296 = vmax.xlane.f32.xlu0 %v295
    %v297 = vpop.xlane.xlu0 %296
    %v298 = vsub.f32 %v293, %v297
    %v299 = vmul.f32 %v298, 1.442695
    %v300 = vpow.pop %v299
    %v301 = vsel %vm294, %v300, 0.0
    %302 = vadd.xlane.f32.xlu0 %v301
    %v303 = vpop.xlane.xlu0 %302
    %v304 = vrcp.pop %v303
    %v305 = vpack.c.bf16 %v300, %v300
    %v306 = vpack.c.bf16 %v214, %v211
    %v308 = vsel %vm294, %v305, 0
    %310 = vmatprep.subr.bf16.mxu0 0
    %311 = vmatpush1.bf16.msra.mxu0 %v306
    %312 = vmatprep.subr.bf16.mxu0 0
    %313 = vmatpush1.bf16.msra.mxu0 0
    %314 = vmatprep.subr.bf16.mxu0 0
    %315 = vmatpush1.bf16.msra.mxu0 0
    %316 = vmatprep.subr.bf16.mxu0 0
    %317 = vmatpush1.bf16.msra.mxu0 0
    %318 = vmatprep.subr.bf16.mxu0 0
    %319 = vmatpush1.bf16.msra.mxu0 0
    %320 = vmatprep.subr.bf16.mxu0 0
    %321 = vmatpush1.bf16.msra.mxu0 0
    %322 = vmatprep.subr.bf16.mxu0 0
    %323 = vmatpush1.bf16.msra.mxu0 0
    %324 = vmatprep.subr.bf16.mxu0 0
    %325 = vmatpush1.bf16.msra.mxu0 0
    %326 = vmatprep.subr.bf16.mxu0 0
    %327 = vmatpush1.bf16.msra.mxu0 0
    %328 = vmatprep.subr.bf16.mxu0 0
    %329 = vmatpush1.bf16.msra.mxu0 0
    %330 = vmatprep.subr.bf16.mxu0 0
    %331 = vmatpush1.bf16.msra.mxu0 0
    %332 = vmatprep.subr.bf16.mxu0 0
    %333 = vmatpush1.bf16.msra.mxu0 0
    %334 = vmatprep.subr.bf16.mxu0 0
    %335 = vmatpush1.bf16.msra.mxu0 0
    %336 = vmatprep.subr.bf16.mxu0 0
    %337 = vmatpush1.bf16.msra.mxu0 0
    %338 = vmatprep.subr.bf16.mxu0 0
    %339 = vmatpush1.bf16.msra.mxu0 0
    %340 = vmatprep.subr.bf16.mxu0 0
    %341 = vmatpush1.bf16.msra.mxu0 0
    %342 = vmatprep.mubr.bf16.mxu0 0
    %343 = vmatmul.mubr.bf16.gmra.mrb[0].mxu0 %v308
    %v344 = vpop.f32.mrb[0].mxu0
    %v345 = vadd.f32 0.0, %v344
    %v346 = vpop.f32.mrb[0].mxu0
    %v347 = vpop.f32.mrb[0].mxu0
    %v348 = vpop.f32.mrb[0].mxu0
    %349 = vdwg.mxu0
    %v350 = vmul.f32 %v304, %v345
    %v351 = vadd.f32 %v167, %v350
    %352 = vxpose.xlu0.b32.start [1/16] %v225, 128
    %353 = vxpose.xlu0.b32.cont [2/16] 0.0, 128
    %354 = vxpose.xlu0.b32.cont [3/16] 0.0, 128
    %355 = vxpose.xlu0.b32.cont [4/16] 0.0, 128
    %356 = vxpose.xlu0.b32.cont [5/16] 0.0, 128
    %357 = vxpose.xlu0.b32.cont [6/16] 0.0, 128
    %358 = vxpose.xlu0.b32.cont [7/16] 0.0, 128
    %359 = vxpose.xlu0.b32.cont [8/16] 0.0, 128
    %360 = vxpose.xlu0.b32.cont [9/16] 0.0, 128
    %361 = vxpose.xlu0.b32.cont [10/16] 0.0, 128
    %362 = vxpose.xlu0.b32.cont [11/16] 0.0, 128
    %363 = vxpose.xlu0.b32.cont [12/16] 0.0, 128
    %364 = vxpose.xlu0.b32.cont [13/16] 0.0, 128
    %365 = vxpose.xlu0.b32.cont [14/16] 0.0, 128
    %366 = vxpose.xlu0.b32.cont [15/16] 0.0, 128
    %367 = vxpose.xlu0.b32.end [16/16] 0.0, 128
    %v368 = vpop.trf.xlu0
    %v369 = vpop.trf.xlu0
    %v370 = vpop.trf.xlu0
    %v371 = vpop.trf.xlu0
    %v372 = vpop.trf.xlu0
    %v373 = vpop.trf.xlu0
    %v374 = vpop.trf.xlu0
    %v375 = vpop.trf.xlu0
    %v376 = vpop.trf.xlu0
    %v377 = vpop.trf.xlu0
    %v378 = vpop.trf.xlu0
    %v379 = vpop.trf.xlu0
    %v380 = vpop.trf.xlu0
    %v381 = vpop.trf.xlu0
    %v382 = vpop.trf.xlu0
    %v383 = vpop.trf.xlu0
    %v384 = vlaneseq
    %v385 = vshrl.u32 %v384, 7
    %v386 = vsub.s32 0, %v385
    %v387 = vrot.slane %v368, %v386
    %v388 = vadd.f32 %v246, %v387
    %v389 = vadd.f32 %v249, %v387
    %v390 = vxor.u32 %v388, 2147483648
    %v391 = vxor.u32 %v389, 2147483648
    %v392 = vmul.f32 %v390, 1.442695
    %v393 = vpow.pop %v392
    %v394 = vmul.f32 %v391, 1.442695
    %v395 = vpow.pop %v394
    %v396 = vadd.f32 %v393, 1.0
    %v397 = vadd.f32 %v395, 1.0
    %v398 = vrcp.pop %v396
    %v399 = vmul.f32 1.0, %v398
    %v400 = vrcp.pop %v397
    %v401 = vmul.f32 1.0, %v400
    %v402 = vadd.f32 %v399, %v109
    %v403 = vadd.f32 %v401, %v110
    %vm404 = vcmask 64512
    %v405 = vsel %vm404, %v402, -inf
    %406 = vmax.xlane.f32.xlu0 %v405
    %v407 = vpop.xlane.xlu0 %406
    %v408 = vsel %vm404, %v403, -inf
    %409 = vmax.xlane.f32.xlu0 %v408
    %v410 = vpop.xlane.xlu0 %409
    %v411 = vsub.f32 %v402, %v407
    %v412 = vsub.f32 %v403, %v410
    %v413 = vmul.f32 %v411, 1.442695
    %v414 = vpow.pop %v413
    %v415 = vmul.f32 %v412, 1.442695
    %v416 = vpow.pop %v415
    %v417 = vsel %vm404, %v414, 0.0
    %418 = vadd.xlane.f32.xlu0 %v417
    %v419 = vpop.xlane.xlu0 %418
    %v420 = vsel %vm404, %v416, 0.0
    %421 = vadd.xlane.f32.xlu0 %v420
    %v422 = vpop.xlane.xlu0 %421
    %v423 = vrcp.pop %v419
    %v424 = vrcp.pop %v422
    %v425 = vpack.c.bf16 %v416, %v414
    %v426 = vpack.c.bf16 %v167, %v167
    %v428 = vsel %vm404, %v425, 0
    %vm430 = vcmask 1043456
    %v432 = vsel %vm430, %v426, 0
    %434 = vmatprep.subr.bf16.mxu0 0
    %435 = vmatpush1.bf16.msra.mxu0 %v432
    %436 = vmatprep.subr.bf16.mxu0 0
    %437 = vmatpush1.bf16.msra.mxu0 0
    %438 = vmatprep.subr.bf16.mxu0 0
    %439 = vmatpush1.bf16.msra.mxu0 0
    %440 = vmatprep.subr.bf16.mxu0 0
    %441 = vmatpush1.bf16.msra.mxu0 0
    %442 = vmatprep.subr.bf16.mxu0 0
    %443 = vmatpush1.bf16.msra.mxu0 0
    %444 = vmatprep.subr.bf16.mxu0 0
    %445 = vmatpush1.bf16.msra.mxu0 0
    %446 = vmatprep.subr.bf16.mxu0 0
    %447 = vmatpush1.bf16.msra.mxu0 0
    %448 = vmatprep.subr.bf16.mxu0 0
    %449 = vmatpush1.bf16.msra.mxu0 0
    %450 = vmatprep.subr.bf16.mxu0 0
    %451 = vmatpush1.bf16.msra.mxu0 0
    %452 = vmatprep.subr.bf16.mxu0 0
    %453 = vmatpush1.bf16.msra.mxu0 0
    %454 = vmatprep.subr.bf16.mxu0 0
    %455 = vmatpush1.bf16.msra.mxu0 0
    %456 = vmatprep.subr.bf16.mxu0 0
    %457 = vmatpush1.bf16.msra.mxu0 0
    %458 = vmatprep.subr.bf16.mxu0 0
    %459 = vmatpush1.bf16.msra.mxu0 0
    %460 = vmatprep.subr.bf16.mxu0 0
    %461 = vmatpush1.bf16.msra.mxu0 0
    %462 = vmatprep.subr.bf16.mxu0 0
    %463 = vmatpush1.bf16.msra.mxu0 0
    %464 = vmatprep.subr.bf16.mxu0 0
    %465 = vmatpush1.bf16.msra.mxu0 0
    %466 = vmatprep.mubr.bf16.mxu0 0
    %467 = vmatmul.mubr.bf16.gmra.mrb[0].mxu0 %v428
    %v468 = vpop.f32.mrb[0].mxu0
    %v469 = vadd.f32 0.0, %v468
    %v470 = vpop.f32.mrb[0].mxu0
    %v471 = vpop.f32.mrb[0].mxu0
    %v472 = vadd.f32 0.0, %v471
    %v473 = vpop.f32.mrb[0].mxu0
    %474 = vdwg.mxu0
    %v475 = vmul.f32 %v423, %v469
    %v476 = vmul.f32 %v424, %v472
    %v477 = vadd.f32 %v211, %v475
    %v478 = vadd.f32 %v214, %v476
    %v479 = vld [vmem:[%s8] sm:$0xf]
    %v480 = vld [vmem:[%s8 + $0x4] sm:$0xf]
    %v481 = vld [vmem:[%s8 + $0x8] sm:$0xf]
    %v482 = vld [vmem:[%s8 + $0xc] sm:$0xf]
    %v483 = vld [vmem:[%s8 + $0x10] sm:$0xf]
    %v484 = vld [vmem:[%s8 + $0x14] sm:$0xf]
    %v485 = vld [vmem:[%s8 + $0x18] sm:$0xf]
    %v486 = vld [vmem:[%s8 + $0x1c] sm:$0xf]
    %v487 = vpack.c.bf16 %v351, %v351
    %v496 = vunpack.c.l.b16 %v479
    %v497 = vunpack.c.l.b16 %v480
    %v498 = vunpack.c.l.b16 %v481
    %v499 = vunpack.c.l.b16 %v482
    %v500 = vunpack.c.l.b16 %v483
    %v501 = vunpack.c.l.b16 %v484
    %v502 = vunpack.c.l.b16 %v485
    %v503 = vunpack.c.l.b16 %v486
    %v504 = vpack.c.b16 %v497, %v496
    %v505 = vpack.c.b16 %v499, %v498
    %v506 = vpack.c.b16 %v501, %v500
    %v507 = vpack.c.b16 %v503, %v502
    %vm512 = vcmask 523264
    %v514 = vsel %vm512, %v487, 0
    %516 = vmatprep.subr.bf16.mxu0 0
    %517 = vmatpush1.bf16.msra.mxu0 %v504
    %518 = vmatprep.subr.bf16.mxu0 0
    %519 = vmatpush1.bf16.msra.mxu0 %v505
    %520 = vmatprep.subr.bf16.mxu0 0
    %521 = vmatpush1.bf16.msra.mxu0 %v506
    %522 = vmatprep.subr.bf16.mxu0 0
    %523 = vmatpush1.bf16.msra.mxu0 %v507
    %524 = vmatprep.subr.bf16.mxu0 0
    %525 = vmatpush1.bf16.msra.mxu0 0
    %526 = vmatprep.subr.bf16.mxu0 0
    %527 = vmatpush1.bf16.msra.mxu0 0
    %528 = vmatprep.subr.bf16.mxu0 0
    %529 = vmatpush1.bf16.msra.mxu0 0
    %530 = vmatprep.subr.bf16.mxu0 0
    %531 = vmatpush1.bf16.msra.mxu0 0
    %532 = vmatprep.subr.bf16.mxu0 0
    %533 = vmatpush1.bf16.msra.mxu0 0
    %534 = vmatprep.subr.bf16.mxu0 0
    %535 = vmatpush1.bf16.msra.mxu0 0
    %536 = vmatprep.subr.bf16.mxu0 0
    %537 = vmatpush1.bf16.msra.mxu0 0
    %538 = vmatprep.subr.bf16.mxu0 0
    %539 = vmatpush1.bf16.msra.mxu0 0
    %540 = vmatprep.subr.bf16.mxu0 0
    %541 = vmatpush1.bf16.msra.mxu0 0
    %542 = vmatprep.subr.bf16.mxu0 0
    %543 = vmatpush1.bf16.msra.mxu0 0
    %544 = vmatprep.subr.bf16.mxu0 0
    %545 = vmatpush1.bf16.msra.mxu0 0
    %546 = vmatprep.subr.bf16.mxu0 0
    %547 = vmatpush1.bf16.msra.mxu0 0
    %548 = vmatprep.mubr.bf16.mxu0 0
    %549 = vmatmul.mubr.bf16.gmra.mrb[0].mxu0 %v514
    %v550 = vpop.f32.mrb[0].mxu0
    %v551 = vadd.f32 0.0, %v550
    %v552 = vpop.f32.mrb[0].mxu0
    %v553 = vpop.f32.mrb[0].mxu0
    %v554 = vpop.f32.mrb[0].mxu0
    %555 = vdwg.mxu0
    %v556 = vpack.c.bf16 %v478, %v477
    %v558 = vsel %vm512, %v556, 0
    %560 = vmatprep.subr.bf16.mxu0 0
    %561 = vmatpush1.bf16.msra.mxu0 %v504
    %562 = vmatprep.subr.bf16.mxu0 0
    %563 = vmatpush1.bf16.msra.mxu0 %v505
    %564 = vmatprep.subr.bf16.mxu0 0
    %565 = vmatpush1.bf16.msra.mxu0 %v506
    %566 = vmatprep.subr.bf16.mxu0 0
    %567 = vmatpush1.bf16.msra.mxu0 %v507
    %568 = vmatprep.subr.bf16.mxu0 0
    %569 = vmatpush1.bf16.msra.mxu0 0
    %570 = vmatprep.subr.bf16.mxu0 0
    %571 = vmatpush1.bf16.msra.mxu0 0
    %572 = vmatprep.subr.bf16.mxu0 0
    %573 = vmatpush1.bf16.msra.mxu0 0
    %574 = vmatprep.subr.bf16.mxu0 0
    %575 = vmatpush1.bf16.msra.mxu0 0
    %576 = vmatprep.subr.bf16.mxu0 0
    %577 = vmatpush1.bf16.msra.mxu0 0
    %578 = vmatprep.subr.bf16.mxu0 0
    %579 = vmatpush1.bf16.msra.mxu0 0
    %580 = vmatprep.subr.bf16.mxu0 0
    %581 = vmatpush1.bf16.msra.mxu0 0
    %582 = vmatprep.subr.bf16.mxu0 0
    %583 = vmatpush1.bf16.msra.mxu0 0
    %584 = vmatprep.subr.bf16.mxu0 0
    %585 = vmatpush1.bf16.msra.mxu0 0
    %586 = vmatprep.subr.bf16.mxu0 0
    %587 = vmatpush1.bf16.msra.mxu0 0
    %588 = vmatprep.subr.bf16.mxu0 0
    %589 = vmatpush1.bf16.msra.mxu0 0
    %590 = vmatprep.subr.bf16.mxu0 0
    %591 = vmatpush1.bf16.msra.mxu0 0
    %592 = vmatprep.mubr.bf16.mxu0 0
    %593 = vmatmul.mubr.bf16.gmra.mrb[0].mxu0 %v558
    %v594 = vpop.f32.mrb[0].mxu0
    %v595 = vadd.f32 0.0, %v594
    %v596 = vpop.f32.mrb[0].mxu0
    %v597 = vpop.f32.mrb[0].mxu0
    %v598 = vadd.f32 0.0, %v597
    %v599 = vpop.f32.mrb[0].mxu0
    %600 = vdwg.mxu0
    %v601 = vld [vmem:[%s9] sm:$0x3]
    %v602 = vlaneseq
    %v603 = vshrl.u32 %v602, 7
    %v604 = vsub.s32 0, %v603
    %v605 = vrot.slane %v601, %v604
    %v606 = vmul.f32 %v351, %v605
    %v607 = vsel %vm512, %v606, 0.0
    %608 = vadd.xlane.f32.xlu0 %v607
    %v609 = vpop.xlane.xlu0 %608
    %v610 = vlaneseq
    %v611 = vshrl.u32 %v610, 7
    %v612 = vsub.s32 1, %v611
    %v613 = vrot.slane %v601, %v612
    %v614 = vmul.f32 %v351, %v613
    %v615 = vsel %vm512, %v614, 0.0
    %616 = vadd.xlane.f32.xlu0 %v615
    %v617 = vpop.xlane.xlu0 %616
    %v618 = vmul.f32 %v477, %v605
    %v619 = vmul.f32 %v478, %v605
    %v620 = vsel %vm512, %v618, 0.0
    %621 = vadd.xlane.f32.xlu0 %v620
    %v622 = vpop.xlane.xlu0 %621
    %v623 = vsel %vm512, %v619, 0.0
    %624 = vadd.xlane.f32.xlu0 %v623
    %v625 = vpop.xlane.xlu0 %624
    %v626 = vmul.f32 %v477, %v613
    %v627 = vmul.f32 %v478, %v613
    %v628 = vsel %vm512, %v626, 0.0
    %629 = vadd.xlane.f32.xlu0 %v628
    %v630 = vpop.xlane.xlu0 %629
    %v631 = vsel %vm512, %v627, 0.0
    %632 = vadd.xlane.f32.xlu0 %v631
    %v633 = vpop.xlane.xlu0 %632
    %v634 = vld [vmem:[%s10] sm:$0x1]
    %635 = vxpose.xlu0.b32.start [1/16] %v622, 128
    %636 = vxpose.xlu0.b32.cont [2/16] %v625, 128
    %637 = vxpose.xlu0.b32.cont [3/16] 0.0, 128
    %638 = vxpose.xlu0.b32.cont [4/16] 0.0, 128
    %639 = vxpose.xlu0.b32.cont [5/16] 0.0, 128
    %640 = vxpose.xlu0.b32.cont [6/16] 0.0, 128
    %641 = vxpose.xlu0.b32.cont [7/16] 0.0, 128
    %642 = vxpose.xlu0.b32.cont [8/16] 0.0, 128
    %643 = vxpose.xlu0.b32.cont [9/16] 0.0, 128
    %644 = vxpose.xlu0.b32.cont [10/16] 0.0, 128
    %645 = vxpose.xlu0.b32.cont [11/16] 0.0, 128
    %646 = vxpose.xlu0.b32.cont [12/16] 0.0, 128
    %647 = vxpose.xlu0.b32.cont [13/16] 0.0, 128
    %648 = vxpose.xlu0.b32.cont [14/16] 0.0, 128
    %649 = vxpose.xlu0.b32.cont [15/16] 0.0, 128
    %650 = vxpose.xlu0.b32.end [16/16] 0.0, 128
    %v651 = vpop.trf.xlu0
    %v652 = vpop.trf.xlu0
    %v653 = vpop.trf.xlu0
    %v654 = vpop.trf.xlu0
    %v655 = vpop.trf.xlu0
    %v656 = vpop.trf.xlu0
    %v657 = vpop.trf.xlu0
    %v658 = vpop.trf.xlu0
    %v659 = vpop.trf.xlu0
    %v660 = vpop.trf.xlu0
    %v661 = vpop.trf.xlu0
    %v662 = vpop.trf.xlu0
    %v663 = vpop.trf.xlu0
    %v664 = vpop.trf.xlu0
    %v665 = vpop.trf.xlu0
    %v666 = vpop.trf.xlu0
    %v667 = vlaneseq
    %v668 = vshrl.u32 %v667, 7
    %v669 = vsub.s32 0, %v668
    %v670 = vrot.slane %v651, %v669
    %v671 = vadd.f32 %v617, %v670
    %v672 = vxor.u32 %v671, 2147483648
    %v673 = vmul.f32 %v672, 1.442695
    %v674 = vpow.pop %v673
    %v675 = vadd.f32 %v674, 1.0
    %v676 = vrcp.pop %v675
    %v677 = vmul.f32 1.0, %v676
    %v678 = vadd.f32 %v677, %v108
    %v679 = vsel %vm294, %v678, -inf
    %680 = vmax.xlane.f32.xlu0 %v679
    %v681 = vpop.xlane.xlu0 %680
    %v682 = vsub.f32 %v678, %v681
    %v683 = vmul.f32 %v682, 1.442695
    %v684 = vpow.pop %v683
    %v685 = vsel %vm294, %v684, 0.0
    %686 = vadd.xlane.f32.xlu0 %v685
    %v687 = vpop.xlane.xlu0 %686
    %v688 = vrcp.pop %v687
    %v689 = vpack.c.bf16 %v684, %v684
    %v690 = vpack.c.bf16 %v598, %v595
    %v692 = vsel %vm294, %v689, 0
    %694 = vmatprep.subr.bf16.mxu0 0
    %695 = vmatpush1.bf16.msra.mxu0 %v690
    %696 = vmatprep.subr.bf16.mxu0 0
    %697 = vmatpush1.bf16.msra.mxu0 0
    %698 = vmatprep.subr.bf16.mxu0 0
    %699 = vmatpush1.bf16.msra.mxu0 0
    %700 = vmatprep.subr.bf16.mxu0 0
    %701 = vmatpush1.bf16.msra.mxu0 0
    %702 = vmatprep.subr.bf16.mxu0 0
    %703 = vmatpush1.bf16.msra.mxu0 0
    %704 = vmatprep.subr.bf16.mxu0 0
    %705 = vmatpush1.bf16.msra.mxu0 0
    %706 = vmatprep.subr.bf16.mxu0 0
    %707 = vmatpush1.bf16.msra.mxu0 0
    %708 = vmatprep.subr.bf16.mxu0 0
    %709 = vmatpush1.bf16.msra.mxu0 0
    %710 = vmatprep.subr.bf16.mxu0 0
    %711 = vmatpush1.bf16.msra.mxu0 0
    %712 = vmatprep.subr.bf16.mxu0 0
    %713 = vmatpush1.bf16.msra.mxu0 0
    %714 = vmatprep.subr.bf16.mxu0 0
    %715 = vmatpush1.bf16.msra.mxu0 0
    %716 = vmatprep.subr.bf16.mxu0 0
    %717 = vmatpush1.bf16.msra.mxu0 0
    %718 = vmatprep.subr.bf16.mxu0 0
    %719 = vmatpush1.bf16.msra.mxu0 0
    %720 = vmatprep.subr.bf16.mxu0 0
    %721 = vmatpush1.bf16.msra.mxu0 0
    %722 = vmatprep.subr.bf16.mxu0 0
    %723 = vmatpush1.bf16.msra.mxu0 0
    %724 = vmatprep.subr.bf16.mxu0 0
    %725 = vmatpush1.bf16.msra.mxu0 0
    %726 = vmatprep.mubr.bf16.mxu0 0
    %727 = vmatmul.mubr.bf16.gmra.mrb[0].mxu0 %v692
    %v728 = vpop.f32.mrb[0].mxu0
    %v729 = vadd.f32 0.0, %v728
    %v730 = vpop.f32.mrb[0].mxu0
    %v731 = vpop.f32.mrb[0].mxu0
    %v732 = vpop.f32.mrb[0].mxu0
    %733 = vdwg.mxu0
    %v734 = vmul.f32 %v688, %v729
    %736 = vrot.lane.b32.xlu0 %v734, 32
    %v737 = vpop.permute.xlu0 %736
    %v739 = vadd.f32 %v551, %v737
    %v741 = vlaneseq
    %v742 = vshrl.u32 %v741, 7
    %v743 = vsub.s32 0, %v742
    %v744 = vrot.slane %v634, %v743
    %745 = vrot.lane.b32.xlu0 %v744, 32
    %v746 = vpop.permute.xlu0 %745
    %v748 = vadd.f32 %v739, %v746
    %v749 = vmax.f32 %v748, 0.0
    %750 = vxpose.xlu0.b32.start [1/16] %v609, 128
    %751 = vxpose.xlu0.b32.cont [2/16] 0.0, 128
    %752 = vxpose.xlu0.b32.cont [3/16] 0.0, 128
    %753 = vxpose.xlu0.b32.cont [4/16] 0.0, 128
    %754 = vxpose.xlu0.b32.cont [5/16] 0.0, 128
    %755 = vxpose.xlu0.b32.cont [6/16] 0.0, 128
    %756 = vxpose.xlu0.b32.cont [7/16] 0.0, 128
    %757 = vxpose.xlu0.b32.cont [8/16] 0.0, 128
    %758 = vxpose.xlu0.b32.cont [9/16] 0.0, 128
    %759 = vxpose.xlu0.b32.cont [10/16] 0.0, 128
    %760 = vxpose.xlu0.b32.cont [11/16] 0.0, 128
    %761 = vxpose.xlu0.b32.cont [12/16] 0.0, 128
    %762 = vxpose.xlu0.b32.cont [13/16] 0.0, 128
    %763 = vxpose.xlu0.b32.cont [14/16] 0.0, 128
    %764 = vxpose.xlu0.b32.cont [15/16] 0.0, 128
    %765 = vxpose.xlu0.b32.end [16/16] 0.0, 128
    %v766 = vpop.trf.xlu0
    %v767 = vpop.trf.xlu0
    %v768 = vpop.trf.xlu0
    %v769 = vpop.trf.xlu0
    %v770 = vpop.trf.xlu0
    %v771 = vpop.trf.xlu0
    %v772 = vpop.trf.xlu0
    %v773 = vpop.trf.xlu0
    %v774 = vpop.trf.xlu0
    %v775 = vpop.trf.xlu0
    %v776 = vpop.trf.xlu0
    %v777 = vpop.trf.xlu0
    %v778 = vpop.trf.xlu0
    %v779 = vpop.trf.xlu0
    %v780 = vpop.trf.xlu0
    %v781 = vpop.trf.xlu0
    %v782 = vlaneseq
    %v783 = vshrl.u32 %v782, 7
    %v784 = vsub.s32 0, %v783
    %v785 = vrot.slane %v766, %v784
    %v786 = vadd.f32 %v630, %v785
    %v787 = vadd.f32 %v633, %v785
    %v788 = vxor.u32 %v786, 2147483648
    %v789 = vxor.u32 %v787, 2147483648
    %v790 = vmul.f32 %v788, 1.442695
    %v791 = vpow.pop %v790
    %v792 = vmul.f32 %v789, 1.442695
    %v793 = vpow.pop %v792
    %v794 = vadd.f32 %v791, 1.0
    %v795 = vadd.f32 %v793, 1.0
    %v796 = vrcp.pop %v794
    %v797 = vmul.f32 1.0, %v796
    %v798 = vrcp.pop %v795
    %v799 = vmul.f32 1.0, %v798
    %v800 = vadd.f32 %v797, %v109
    %v801 = vadd.f32 %v799, %v110
    %v802 = vsel %vm404, %v800, -inf
    %803 = vmax.xlane.f32.xlu0 %v802
    %v804 = vpop.xlane.xlu0 %803
    %v805 = vsel %vm404, %v801, -inf
    %806 = vmax.xlane.f32.xlu0 %v805
    %v807 = vpop.xlane.xlu0 %806
    %v808 = vsub.f32 %v800, %v804
    %v809 = vsub.f32 %v801, %v807
    %v810 = vmul.f32 %v808, 1.442695
    %v811 = vpow.pop %v810
    %v812 = vmul.f32 %v809, 1.442695
    %v813 = vpow.pop %v812
    %v814 = vsel %vm404, %v811, 0.0
    %815 = vadd.xlane.f32.xlu0 %v814
    %v816 = vpop.xlane.xlu0 %815
    %v817 = vsel %vm404, %v813, 0.0
    %818 = vadd.xlane.f32.xlu0 %v817
    %v819 = vpop.xlane.xlu0 %818
    %v820 = vrcp.pop %v816
    %v821 = vrcp.pop %v819
    %v822 = vpack.c.bf16 %v813, %v811
    %v823 = vpack.c.bf16 %v551, %v551
    %v825 = vsel %vm404, %v822, 0
    %v828 = vsel %vm430, %v823, 0
    %830 = vmatprep.subr.bf16.mxu0 0
    %831 = vmatpush1.bf16.msra.mxu0 %v828
    %832 = vmatprep.subr.bf16.mxu0 0
    %833 = vmatpush1.bf16.msra.mxu0 0
    %834 = vmatprep.subr.bf16.mxu0 0
    %835 = vmatpush1.bf16.msra.mxu0 0
    %836 = vmatprep.subr.bf16.mxu0 0
    %837 = vmatpush1.bf16.msra.mxu0 0
    %838 = vmatprep.subr.bf16.mxu0 0
    %839 = vmatpush1.bf16.msra.mxu0 0
    %840 = vmatprep.subr.bf16.mxu0 0
    %841 = vmatpush1.bf16.msra.mxu0 0
    %842 = vmatprep.subr.bf16.mxu0 0
    %843 = vmatpush1.bf16.msra.mxu0 0
    %844 = vmatprep.subr.bf16.mxu0 0
    %845 = vmatpush1.bf16.msra.mxu0 0
    %846 = vmatprep.subr.bf16.mxu0 0
    %847 = vmatpush1.bf16.msra.mxu0 0
    %848 = vmatprep.subr.bf16.mxu0 0
    %849 = vmatpush1.bf16.msra.mxu0 0
    %850 = vmatprep.subr.bf16.mxu0 0
    %851 = vmatpush1.bf16.msra.mxu0 0
    %852 = vmatprep.subr.bf16.mxu0 0
    %853 = vmatpush1.bf16.msra.mxu0 0
    %854 = vmatprep.subr.bf16.mxu0 0
    %855 = vmatpush1.bf16.msra.mxu0 0
    %856 = vmatprep.subr.bf16.mxu0 0
    %857 = vmatpush1.bf16.msra.mxu0 0
    %858 = vmatprep.subr.bf16.mxu0 0
    %859 = vmatpush1.bf16.msra.mxu0 0
    %860 = vmatprep.subr.bf16.mxu0 0
    %861 = vmatpush1.bf16.msra.mxu0 0
    %862 = vmatprep.mubr.bf16.mxu0 0
    %863 = vmatmul.mubr.bf16.gmra.mrb[0].mxu0 %v825
    %v864 = vpop.f32.mrb[0].mxu0
    %v865 = vadd.f32 0.0, %v864
    %v866 = vpop.f32.mrb[0].mxu0
    %v867 = vpop.f32.mrb[0].mxu0
    %v868 = vadd.f32 0.0, %v867
    %v869 = vpop.f32.mrb[0].mxu0
    %870 = vdwg.mxu0
    %v871 = vmul.f32 %v820, %v865
    %v872 = vmul.f32 %v821, %v868
    %875 = vrot.lane.b32.xlu0 %v871, 32
    %v876 = vpop.permute.xlu0 %875
    %877 = vrot.lane.b32.xlu0 %v872, 32
    %v878 = vpop.permute.xlu0 %877
    %v881 = vadd.f32 %v595, %v876
    %v882 = vadd.f32 %v598, %v878
    %v883 = vadd.f32 %v881, %v746
    %v884 = vadd.f32 %v882, %v746
    %v885 = vmax.f32 %v883, 0.0
    %v886 = vmax.f32 %v884, 0.0
    %v887 = vld [vmem:[#allocation5] sm:$0xff]
    %888 = vst.msk [vmem:[#allocation11] sm:$0xff] %vm128, %v887
    %vm889 = vcmask 523520
    %890 = vst.msk [vmem:[#allocation11] sm:$0xff] %vm889, %v749
    %v891 = vld [vmem:[#allocation7] sm:$0xff]
    %v892 = vld [vmem:[#allocation7 + $0x8] sm:$0xff]
    %893 = vst.msk [vmem:[#allocation12] sm:$0xff] %vm128, %v891
    %894 = vst.msk [vmem:[#allocation12 + $0x8] sm:$0xff] %vm128, %v892
    %895 = vst.msk [vmem:[#allocation12] sm:$0xff] %vm889, %v885
    %896 = vst.msk [vmem:[#allocation12 + $0x8] sm:$0xff] %vm889, %v886
    // Predicated region
    $region66: #{tpu_custom_call.1} parent=1 // pred_check
      _
    $region67: #{tpu_custom_call.1} parent=1 // pred_check_branch
      %898 = sbr.rel (0) target = $region69
    $region68: #{tpu_custom_call.1} parent=1 // pred_region
      %s900 = ssub.s32 128, 128
      %901 = vsyncadd [#allocation4], %s900
      %s903 = sshll.u32 [#allocation11], 4
      %s904 = int_to_ptr.vmem [resolvable:$true] %s903
      %906 = dma.vmem_to_hbm [thread:$0]  %s904, 128, %s11, [#allocation4]
    $region69: #{tpu_custom_call.1} parent=1 // pred_fallthru
      _
    // Predicated region
    $region70: #{tpu_custom_call.1} parent=1 // pred_check
      _
    $region71: #{tpu_custom_call.1} parent=1 // pred_check_branch
      %908 = sbr.rel (0) target = $region73
    $region72: #{tpu_custom_call.1} parent=1 // pred_region
      %s910 = ssub.s32 256, 256
      %911 = vsyncadd [#allocation13], %s910
      %s912 = sshll.u32 [#allocation12], 4
      %s913 = int_to_ptr.vmem [resolvable:$true] %s912
      %918 = dma.vmem_to_hbm [thread:$0]  %s913, 256, %s12, [#allocation13], 128, 128, 8
    $region73: #{tpu_custom_call.1} parent=1 // pred_fallthru
      _
    // Predicated region
    $region74: #{tpu_custom_call.1} parent=1 // pred_check
      _
    $region75: #{tpu_custom_call.1} parent=1 // pred_check_branch
      %920 = sbr.rel (0) target = $region77
    $region76: #{tpu_custom_call.1} parent=1 // pred_region
      %921 = dma.done [#allocation4], 128
    $region77: #{tpu_custom_call.1} parent=1 // pred_fallthru
      _
    // Predicated region
    $region78: #{tpu_custom_call.1} parent=1 // pred_check
      _
    $region79: #{tpu_custom_call.1} parent=1 // pred_check_branch
      %923 = sbr.rel (0) target = $region81
    $region80: #{tpu_custom_call.1} parent=1 // pred_region
      %924 = dma.done [#allocation13], 256
    $region81: #{tpu_custom_call.1} parent=1 // pred_fallthru
      _
    %925 = vsyncpa [#allocation3], 1
    %926 = vsyncpa [#allocation6], 1
    %927 = vsyncpa [#allocation9], 1
    %928 = vsyncpa [#allocation4], 1
    %929 = vsyncpa [#allocation13], 1

</llo_original>
